<compile_context>
chip_gen: v5e
topology: v5e:2x2
jax: 0.10.0
libtpu: 0.0.40
codegen_flags: <defaults>
</compile_context>

<pallas_src>
import math

import jax
import jax.numpy as jnp
from jax.experimental import pallas as pl
from jax.experimental.pallas import tpu as pltpu

LEAKY_SLOPE = 0.01  # nn.LeakyReLU default negative_slope
LANE = 128
SUBLANE = 8


def _round_up(x, m):
    return ((x + m - 1) // m) * m


def _leaky_relu(x):
    return jnp.where(x >= 0, x, LEAKY_SLOPE * x)


def _make_actor_kernel(action_dim):
    """Build the kernel with the (static) action_dim baked in for the output mask."""

    def kernel(ma_ref, x_ref, w1_ref, w2_ref, w3_ref,
               b1_ref, b2_ref, b3_ref, out_ref):
        max_action = ma_ref[0, 0]                      # SMEM scalar

        x = x_ref[...]                                 # (TILE_B, state_dims) f32

        # Layer 1: Linear + LeakyReLU (bf16 at the MXU, f32 accumulate & VPU math).
        h = jnp.dot(x.astype(jnp.bfloat16), w1_ref[...],
                    preferred_element_type=jnp.float32)
        h = _leaky_relu(h + b1_ref[...])

        # Layer 2: Linear + LeakyReLU.
        h = jnp.dot(h.astype(jnp.bfloat16), w2_ref[...],
                    preferred_element_type=jnp.float32)
        h = _leaky_relu(h + b2_ref[...])

        # Layer 3: Linear.  W3/b3 columns are duplicated at pack time, so
        # columns [0:A] and [A:2A] of `before` both hold before_tanh.
        before = jnp.dot(h.astype(jnp.bfloat16), w3_ref[...],
                         preferred_element_type=jnp.float32)
        before = before + b3_ref[...]

        o1 = jnp.tanh(before) * max_action             # tanh on EUP, scale on VPU

        # Pack [o1 | before_tanh] into one lane-dense slab with a lane select:
        # lanes < A take the tanh-scaled value, the rest keep the pre-tanh value.
        lane = jax.lax.broadcasted_iota(jnp.int32, before.shape, 1)
        out_ref[...] = jnp.where(lane < action_dim, o1, before).astype(out_ref.dtype)

    return kernel


def actor_forward(state, packed_params, max_action, action_dim):
    """Run the actor MLP, batched over a grid with VMEM-resident weights."""
    w1p, w2p, w3p, b1p, b2p, b3p = packed_params
    batch, state_dims = state.shape
    hid = w1p.shape[1]        # padded hidden width (multiple of 128)
    out_w = w3p.shape[1]      # packed output width (multiple of 128, >= 2*action_dim)

    # Batch tile: multiple of 8 sublanes, capped so the double-buffered in/out
    # blocks stay far under v7x's 32 MiB scoped-VMEM default.
    tile_b = min(1024, _round_up(max(batch, 1), SUBLANE))
    pb = _round_up(batch, tile_b)

    x = state.astype(jnp.float32)
    if pb != batch:
        x = jnp.zeros((pb, state_dims), jnp.float32).at[:batch].set(x)

    ma = jnp.full((1, 1), max_action, jnp.float32)

    out = pl.pallas_call(
        _make_actor_kernel(action_dim),
        out_shape=jax.ShapeDtypeStruct((pb, out_w), jnp.float32),
        grid=(pb // tile_b,),
        in_specs=[
            pl.BlockSpec(memory_space=pltpu.MemorySpace.SMEM),       # max_action (1,1)
            pl.BlockSpec((tile_b, state_dims), lambda i: (i, 0)),    # state tile (native width)
            pl.BlockSpec((state_dims, hid), lambda i: (0, 0)),       # W1 (resident)
            pl.BlockSpec((hid, hid), lambda i: (0, 0)),              # W2 (resident)
            pl.BlockSpec((hid, out_w), lambda i: (0, 0)),            # W3 packed (resident)
            pl.BlockSpec((1, hid), lambda i: (0, 0)),                # b1 (resident)
            pl.BlockSpec((1, hid), lambda i: (0, 0)),                # b2 (resident)
            pl.BlockSpec((1, out_w), lambda i: (0, 0)),              # b3 packed (resident)
        ],
        out_specs=pl.BlockSpec((tile_b, out_w), lambda i: (i, 0)),
        compiler_params=pltpu.CompilerParams(
            dimension_semantics=("parallel",)),
    )(ma, x, w1p, w2p, w3p, b1p, b2p, b3p)

    o1 = out[:batch, :action_dim]
    before_tanh = out[:batch, action_dim:2 * action_dim]
    return o1, before_tanh


def init_actor_params(key, state_dims, layer1_dims, layer2_dims, action_dim):
    """Deterministic init mimicking nn.Linear's U(-1/sqrt(fan_in), 1/sqrt(fan_in)).

    Weights are stored as [in_features, out_features] (already transposed),
    so each layer is y = x @ W + b, matching PyTorch's x @ W.T + b.
    """
    keys = jax.random.split(key, 6)

    def linear(kw, kb, fan_in, fan_out):
        bound = 1.0 / math.sqrt(fan_in)
        w = jax.random.uniform(kw, (fan_in, fan_out), jnp.float32, -bound, bound)
        b = jax.random.uniform(kb, (fan_out,), jnp.float32, -bound, bound)
        return w, b

    w1, b1 = linear(keys[0], keys[1], state_dims, layer1_dims)
    w2, b2 = linear(keys[2], keys[3], layer1_dims, layer2_dims)
    w3, b3 = linear(keys[4], keys[5], layer2_dims, action_dim)
    return (w1, b1, w2, b2, w3, b3)


def pack_actor_params(params, action_dim):
    """Zero-pad hidden dims to a 128 multiple, cast weights to bf16, and duplicate
    the last layer's columns so o1 and before_tanh share one lane-dense output slab.

    The layer-1 contracting dim (state_dims) is kept native so the state input
    does not have to be lane-padded in HBM."""
    w1, b1, w2, b2, w3, b3 = params
    state_dims = w1.shape[0]
    hid = _round_up(max(w1.shape[1], w2.shape[1], w3.shape[0]), LANE)
    out_w = _round_up(2 * action_dim, LANE)

    def pad_w(w, rows, cols):
        out = jnp.zeros((rows, cols), jnp.float32)
        return out.at[:w.shape[0], :w.shape[1]].set(w)

    w1p = pad_w(w1, state_dims, hid).astype(jnp.bfloat16)
    w2p = pad_w(w2, hid, hid).astype(jnp.bfloat16)

    w3p = jnp.zeros((hid, out_w), jnp.float32)
    w3p = w3p.at[:w3.shape[0], :action_dim].set(w3)
    w3p = w3p.at[:w3.shape[0], action_dim:2 * action_dim].set(w3)
    w3p = w3p.astype(jnp.bfloat16)

    b1p = jnp.zeros((1, hid), jnp.float32).at[0, :b1.shape[0]].set(b1)
    b2p = jnp.zeros((1, hid), jnp.float32).at[0, :b2.shape[0]].set(b2)
    b3p = jnp.zeros((1, out_w), jnp.float32)
    b3p = b3p.at[0, :action_dim].set(b3).at[0, action_dim:2 * action_dim].set(b3)

    return (w1p, w2p, w3p, b1p, b2p, b3p)


def actor_reference(state, params, max_action):
    """Pure-JAX reference mirroring the kernel's numerics (bf16 at the matmuls,
    f32 everywhere else)."""
    w1, b1, w2, b2, w3, b3 = params

    def mm(x, w):
        return jnp.dot(x.astype(jnp.bfloat16), w.astype(jnp.bfloat16),
                       preferred_element_type=jnp.float32)

    h1 = _leaky_relu(mm(state, w1) + b1)
    h2 = _leaky_relu(mm(h1, w2) + b2)
    before = mm(h2, w3) + b3
    return jnp.tanh(before) * max_action, before


if __name__ == "__main__":
    # Small shapes consistent with the module's constructor.
    batch = 2
    state_dims = 16
    layer1_dims = 32
    layer2_dims = 32
    action_dim = 2
    max_action = 1.0
    mode = "TD3"  # mode only affects a host-side attribute, not the device math.

    key = jax.random.PRNGKey(0)
    k_params, k_state = jax.random.split(key)

    params = init_actor_params(k_params, state_dims, layer1_dims,
                               layer2_dims, action_dim)
    n_params = sum(p.size for p in params)
    print(f"actor parameter count: {n_params}")

    packed = pack_actor_params(params, action_dim)
    state = jax.random.normal(k_state, (batch, state_dims), jnp.float32)

    o1, before_tanh = actor_forward(state, packed, max_action, action_dim)
    o1 = jax.block_until_ready(o1)
    before_tanh = jax.block_until_ready(before_tanh)

    # Sanity check against a pure-JAX reference with matching bf16-MXU numerics.
    o1_ref, before_ref = actor_reference(state, params, max_action)
    assert o1.shape == (batch, action_dim)
    assert before_tanh.shape == (batch, action_dim)
    assert jnp.allclose(before_tanh, before_ref, atol=1e-3, rtol=1e-3)
    assert jnp.allclose(o1, o1_ref, atol=1e-3, rtol=1e-3)

    print("KERNEL_OK")
</pallas_src>

<mosaic_0001>
module attributes {stable_mosaic.version = 11 : i64} {
  func.func @kernel(%arg0: i32, %arg1: memref<1x1xf32, #tpu.memory_space<smem>>, %arg2: memref<8x16xf32, #tpu.memory_space<vmem>>, %arg3: memref<16x128xbf16, #tpu.memory_space<vmem>>, %arg4: memref<128x128xbf16, #tpu.memory_space<vmem>>, %arg5: memref<128x128xbf16, #tpu.memory_space<vmem>>, %arg6: memref<1x128xf32, #tpu.memory_space<vmem>>, %arg7: memref<1x128xf32, #tpu.memory_space<vmem>>, %arg8: memref<1x128xf32, #tpu.memory_space<vmem>>, %arg9: memref<8x128xf32, #tpu.memory_space<vmem>>) attributes {dimension_semantics = [#tpu.dimension_semantics<parallel>], iteration_bounds = array<i64: 1>, scalar_prefetch = 0 : i64, scratch_operands = 0 : i64, tpu.core_type = #tpu.core_type<tc>, window_params = [{transform_indices = @transform_0, window_bounds = array<i64: 1, 1>}, {transform_indices = @transform_1, window_bounds = array<i64: 8, 16>}, {pipeline_mode = #tpu.pipeline_mode<synchronous>, transform_indices = @transform_2, window_bounds = array<i64: 16, 128>}, {pipeline_mode = #tpu.pipeline_mode<synchronous>, transform_indices = @transform_3, window_bounds = array<i64: 128, 128>}, {pipeline_mode = #tpu.pipeline_mode<synchronous>, transform_indices = @transform_4, window_bounds = array<i64: 128, 128>}, {pipeline_mode = #tpu.pipeline_mode<synchronous>, transform_indices = @transform_5, window_bounds = array<i64: 1, 128>}, {pipeline_mode = #tpu.pipeline_mode<synchronous>, transform_indices = @transform_6, window_bounds = array<i64: 1, 128>}, {pipeline_mode = #tpu.pipeline_mode<synchronous>, transform_indices = @transform_7, window_bounds = array<i64: 1, 128>}, {transform_indices = @transform_8, window_bounds = array<i64: 8, 128>}]} {
    %c0 = arith.constant 0 : index
    %c0_0 = arith.constant 0 : index
    %0 = memref.load %arg1[%c0, %c0_0] : memref<1x1xf32, #tpu.memory_space<smem>>
    %c0_1 = arith.constant 0 : index
    %c0_2 = arith.constant 0 : index
    %1 = vector.load %arg2[%c0_1, %c0_2] : memref<8x16xf32, #tpu.memory_space<vmem>>, vector<8x16xf32>
    %2 = arith.truncf %1 : vector<8x16xf32> to vector<8x16xbf16>
    %c0_3 = arith.constant 0 : index
    %c0_4 = arith.constant 0 : index
    %3 = vector.load %arg3[%c0_3, %c0_4] : memref<16x128xbf16, #tpu.memory_space<vmem>>, vector<16x128xbf16>
    %cst = arith.constant dense<0.000000e+00> : vector<8x128xf32>
    %4 = tpu.matmul %2, %3, %cst {dimension_numbers = #tpu.dot_dimension_numbers<[1], [0], [0], [1], [0, 0, 1, 1], [], []>} : vector<8x16xbf16>, vector<16x128xbf16>, vector<8x128xf32> -> vector<8x128xf32>
    %c0_5 = arith.constant 0 : index
    %c0_6 = arith.constant 0 : index
    %5 = vector.load %arg6[%c0_5, %c0_6] : memref<1x128xf32, #tpu.memory_space<vmem>>, vector<1x128xf32>
    %6 = vector.broadcast %5 : vector<1x128xf32> to vector<8x128xf32>
    %7 = arith.addf %4, %6 : vector<8x128xf32>
    %cst_7 = arith.constant 0.000000e+00 : f32
    %8 = vector.broadcast %cst_7 : f32 to vector<8x128xf32>
    %9 = arith.cmpf oge, %7, %8 : vector<8x128xf32>
    %cst_8 = arith.constant 0.00999999977 : f32
    %10 = vector.broadcast %cst_8 : f32 to vector<8x128xf32>
    %11 = arith.mulf %10, %7 : vector<8x128xf32>
    %12 = arith.select %9, %7, %11 : vector<8x128xi1>, vector<8x128xf32>
    %13 = arith.truncf %12 : vector<8x128xf32> to vector<8x128xbf16>
    %c0_9 = arith.constant 0 : index
    %c0_10 = arith.constant 0 : index
    %14 = vector.load %arg4[%c0_9, %c0_10] : memref<128x128xbf16, #tpu.memory_space<vmem>>, vector<128x128xbf16>
    %cst_11 = arith.constant dense<0.000000e+00> : vector<8x128xf32>
    %15 = tpu.matmul %13, %14, %cst_11 {dimension_numbers = #tpu.dot_dimension_numbers<[1], [0], [0], [1], [0, 0, 1, 1], [], []>} : vector<8x128xbf16>, vector<128x128xbf16>, vector<8x128xf32> -> vector<8x128xf32>
    %c0_12 = arith.constant 0 : index
    %c0_13 = arith.constant 0 : index
    %16 = vector.load %arg7[%c0_12, %c0_13] : memref<1x128xf32, #tpu.memory_space<vmem>>, vector<1x128xf32>
    %17 = vector.broadcast %16 : vector<1x128xf32> to vector<8x128xf32>
    %18 = arith.addf %15, %17 : vector<8x128xf32>
    %cst_14 = arith.constant 0.000000e+00 : f32
    %19 = vector.broadcast %cst_14 : f32 to vector<8x128xf32>
    %20 = arith.cmpf oge, %18, %19 : vector<8x128xf32>
    %cst_15 = arith.constant 0.00999999977 : f32
    %21 = vector.broadcast %cst_15 : f32 to vector<8x128xf32>
    %22 = arith.mulf %21, %18 : vector<8x128xf32>
    %23 = arith.select %20, %18, %22 : vector<8x128xi1>, vector<8x128xf32>
    %24 = arith.truncf %23 : vector<8x128xf32> to vector<8x128xbf16>
    %c0_16 = arith.constant 0 : index
    %c0_17 = arith.constant 0 : index
    %25 = vector.load %arg5[%c0_16, %c0_17] : memref<128x128xbf16, #tpu.memory_space<vmem>>, vector<128x128xbf16>
    %cst_18 = arith.constant dense<0.000000e+00> : vector<8x128xf32>
    %26 = tpu.matmul %24, %25, %cst_18 {dimension_numbers = #tpu.dot_dimension_numbers<[1], [0], [0], [1], [0, 0, 1, 1], [], []>} : vector<8x128xbf16>, vector<128x128xbf16>, vector<8x128xf32> -> vector<8x128xf32>
    %c0_19 = arith.constant 0 : index
    %c0_20 = arith.constant 0 : index
    %27 = vector.load %arg8[%c0_19, %c0_20] : memref<1x128xf32, #tpu.memory_space<vmem>>, vector<1x128xf32>
    %28 = vector.broadcast %27 : vector<1x128xf32> to vector<8x128xf32>
    %29 = arith.addf %26, %28 : vector<8x128xf32>
    %30 = math.tanh %29 : vector<8x128xf32>
    %31 = vector.broadcast %0 : f32 to vector<8x128xf32>
    %32 = arith.mulf %30, %31 : vector<8x128xf32>
    %33 = tpu.iota {dimensions = array<i32: 1>} : vector<8x128xi32>
    %c2_i32 = arith.constant 2 : i32
    %34 = vector.broadcast %c2_i32 : i32 to vector<8x128xi32>
    %35 = arith.cmpi slt, %33, %34 : vector<8x128xi32>
    %36 = arith.select %35, %32, %29 : vector<8x128xi1>, vector<8x128xf32>
    %c0_21 = arith.constant 0 : index
    %c0_22 = arith.constant 0 : index
    %37 = vector.load %arg9[%c0_21, %c0_22] : memref<8x128xf32, #tpu.memory_space<vmem>>, vector<8x128xf32>
    tpu.vector_store %arg9[%c0_21, %c0_22], %36 {strides = array<i32>} : memref<8x128xf32, #tpu.memory_space<vmem>>, vector<8x128xf32>,
    return
  }
  func.func @transform_0(%arg0: i32) -> (i32, i32) {
    %c0_i32 = arith.constant 0 : i32
    %c0_i32_0 = arith.constant 0 : i32
    %c0_i32_1 = arith.constant 0 : i32
    return %c0_i32, %c0_i32_0 : i32, i32
  }
  func.func @transform_1(%arg0: i32) -> (i32, i32) {
    %c0_i32 = arith.constant 0 : i32
    %c0_i32_0 = arith.constant 0 : i32
    return %arg0, %c0_i32 : i32, i32
  }
  func.func @transform_2(%arg0: i32) -> (i32, i32) {
    %c0_i32 = arith.constant 0 : i32
    %c0_i32_0 = arith.constant 0 : i32
    %c0_i32_1 = arith.constant 0 : i32
    return %c0_i32, %c0_i32_0 : i32, i32
  }
  func.func @transform_3(%arg0: i32) -> (i32, i32) {
    %c0_i32 = arith.constant 0 : i32
    %c0_i32_0 = arith.constant 0 : i32
    %c0_i32_1 = arith.constant 0 : i32
    return %c0_i32, %c0_i32_0 : i32, i32
  }
  func.func @transform_4(%arg0: i32) -> (i32, i32) {
    %c0_i32 = arith.constant 0 : i32
    %c0_i32_0 = arith.constant 0 : i32
    %c0_i32_1 = arith.constant 0 : i32
    return %c0_i32, %c0_i32_0 : i32, i32
  }
  func.func @transform_5(%arg0: i32) -> (i32, i32) {
    %c0_i32 = arith.constant 0 : i32
    %c0_i32_0 = arith.constant 0 : i32
    %c0_i32_1 = arith.constant 0 : i32
    return %c0_i32, %c0_i32_0 : i32, i32
  }
  func.func @transform_6(%arg0: i32) -> (i32, i32) {
    %c0_i32 = arith.constant 0 : i32
    %c0_i32_0 = arith.constant 0 : i32
    %c0_i32_1 = arith.constant 0 : i32
    return %c0_i32, %c0_i32_0 : i32, i32
  }
  func.func @transform_7(%arg0: i32) -> (i32, i32) {
    %c0_i32 = arith.constant 0 : i32
    %c0_i32_0 = arith.constant 0 : i32
    %c0_i32_1 = arith.constant 0 : i32
    return %c0_i32, %c0_i32_0 : i32, i32
  }
  func.func @transform_8(%arg0: i32) -> (i32, i32) {
    %c0_i32 = arith.constant 0 : i32
    %c0_i32_0 = arith.constant 0 : i32
    return %arg0, %c0_i32 : i32, i32
  }
}

</mosaic_0001>

<llo_original>
// kernel: tpu_custom_call.1
$region0: #{tpu_custom_call.1}
  #allocation0 [shape = 'u32[]', space=smem, size = 0x4, offset = 0x4, fixed_abs, tag = 'smem constant byte address 0x4 - core index']
  #allocation1 [shape = 'u32[72,128]{1,0:T(1,128)}', space=vmem, size = 0x9000, scoped, tag = 'internal scratch']
  #allocation2 [shape = 'f32[1,1]{1,0:T(1,128)S(6)}', space=smem, size = 0x200, scoped, tag = 'scoped memory for tpu_custom_call.1']
  %s0 = inlined_call_operand.<no memory space> [shape: f32[1,1], index: 0, kind: input, shape index: {}]
  %s1 = inlined_call_operand.hbm [shape: f32[8,16], index: 1, kind: input, shape index: {}]
  %s2 = inlined_call_operand.hbm [shape: bf16[16,128], index: 2, kind: input, shape index: {}]
  %s3 = inlined_call_operand.hbm [shape: bf16[128,128], index: 3, kind: input, shape index: {}]
  %s4 = inlined_call_operand.hbm [shape: bf16[128,128], index: 4, kind: input, shape index: {}]
  %s5 = inlined_call_operand.vmem [shape: f32[1,128], index: 5, kind: input, shape index: {}]
  %s6 = inlined_call_operand.vmem [shape: f32[1,128], index: 6, kind: input, shape index: {}]
  %s7 = inlined_call_operand.vmem [shape: f32[1,128], index: 7, kind: input, shape index: {}]
  %s8 = inlined_call_operand.hbm [shape: f32[8,128], index: 8, kind: output, shape index: {}]
  %s9 = sld [smem:[#allocation0]]
  $region58: #{tpu_custom_call.1} parent=0
    _
  %s11 = ssub.s32 1, %s9
  %s12 = scalar_select 0, %s11, %s9
  %13 = sst [smem:[#allocation2]] %s0
  $region1: #{tpu_custom_call.1} parent=0
    #allocation3 [shape = 'u8[4096]{0}', space=vmem, size = 0x1000, scoped, tag = 'input window, operand 1, single buffered']
    #allocation4 [shape = 's32[1]{0}', space=sflag, size = 0x4, scoped, tag = 'scoped memory for tpu_custom_call.1']
    #allocation5 [shape = 's32[1]{0}', space=sflag, size = 0x4, scoped, tag = 'scoped memory for tpu_custom_call.1']
    #allocation6 [shape = 'u8[4096]{0}', space=vmem, size = 0x1000, scoped, tag = 'input window, operand 2, single buffered']
    #allocation7 [shape = 's32[1]{0}', space=sflag, size = 0x4, scoped, tag = 'scoped memory for tpu_custom_call.1']
    #allocation8 [shape = 'u8[32768]{0}', space=vmem, size = 0x8000, scoped, tag = 'input window, operand 3, single buffered']
    #allocation9 [shape = 'u8[32768]{0}', space=vmem, size = 0x8000, scoped, tag = 'input window, operand 4, single buffered']
    #allocation10 [shape = 's32[1]{0}', space=sflag, size = 0x4, scoped, tag = 'scoped memory for tpu_custom_call.1']
    #allocation11 [shape = 'u8[4096]{0}', space=vmem, size = 0x1000, scoped, tag = 'output window, operand 0, single buffered']
    %14 = vsyncpa [#allocation4], 0
    %15 = vsyncpa [#allocation7], 0
    %16 = vsyncpa [#allocation10], 0
    %17 = vsyncpa [#allocation5], 0
    // Predicated region
    $region2: #{tpu_custom_call.1} parent=1 // pred_check
      _
    $region3: #{tpu_custom_call.1} parent=1 // pred_check_branch
      %19 = sbr.rel (0) target = $region5
    $region4: #{tpu_custom_call.1} parent=1 // pred_region
      _
    $region5: #{tpu_custom_call.1} parent=1 // pred_fallthru
      _
    // Predicated region
    $region6: #{tpu_custom_call.1} parent=1 // pred_check
      _
    $region7: #{tpu_custom_call.1} parent=1 // pred_check_branch
      %21 = sbr.rel (0) target = $region9
    $region8: #{tpu_custom_call.1} parent=1 // pred_region
      %23 = vsyncadd [#allocation4], 0
      %s25 = sshll.u32 %s1, 4
      %s26 = int_to_ptr.hbm [resolvable:$true] %s25
      %s27 = sshll.u32 [#allocation3], 4
      %s28 = int_to_ptr.vmem [resolvable:$true] %s27
      %30 = dma.hbm_to_vmem [thread:$0]  %s26, 128, %s28, [#allocation4]
    $region9: #{tpu_custom_call.1} parent=1 // pred_fallthru
      _
    // Predicated region
    $region10: #{tpu_custom_call.1} parent=1 // pred_check
      _
    $region11: #{tpu_custom_call.1} parent=1 // pred_check_branch
      %32 = sbr.rel (0) target = $region13
    $region12: #{tpu_custom_call.1} parent=1 // pred_region
      %34 = vsyncadd [#allocation7], 0
      %s35 = sshll.u32 %s2, 4
      %s36 = int_to_ptr.hbm [resolvable:$true] %s35
      %s37 = sshll.u32 [#allocation6], 4
      %s38 = int_to_ptr.vmem [resolvable:$true] %s37
      %43 = dma.hbm_to_vmem [thread:$0]  %s36, 128, %s38, [#allocation7], 64, 64, 4
    $region13: #{tpu_custom_call.1} parent=1 // pred_fallthru
      _
    // Predicated region
    $region14: #{tpu_custom_call.1} parent=1 // pred_check
      _
    $region15: #{tpu_custom_call.1} parent=1 // pred_check_branch
      %45 = sbr.rel (0) target = $region17
    $region16: #{tpu_custom_call.1} parent=1 // pred_region
      %47 = vsyncadd [#allocation7], 0
      %s48 = sshll.u32 %s3, 4
      %s49 = int_to_ptr.hbm [resolvable:$true] %s48
      %s50 = sshll.u32 [#allocation8], 4
      %s51 = int_to_ptr.vmem [resolvable:$true] %s50
      %56 = dma.hbm_to_vmem [thread:$0]  %s49, 1024, %s51, [#allocation7], 64, 64, 4
    $region17: #{tpu_custom_call.1} parent=1 // pred_fallthru
      _
    // Predicated region
    $region18: #{tpu_custom_call.1} parent=1 // pred_check
      _
    $region19: #{tpu_custom_call.1} parent=1 // pred_check_branch
      %58 = sbr.rel (0) target = $region21
    $region20: #{tpu_custom_call.1} parent=1 // pred_region
      %60 = vsyncadd [#allocation10], 0
      %s61 = sshll.u32 %s4, 4
      %s62 = int_to_ptr.hbm [resolvable:$true] %s61
      %s63 = sshll.u32 [#allocation9], 4
      %s64 = int_to_ptr.vmem [resolvable:$true] %s63
      %69 = dma.hbm_to_vmem [thread:$0]  %s62, 1024, %s64, [#allocation10], 64, 64, 4
    $region21: #{tpu_custom_call.1} parent=1 // pred_fallthru
      _
    // Predicated region
    $region22: #{tpu_custom_call.1} parent=1 // pred_check
      _
    $region23: #{tpu_custom_call.1} parent=1 // pred_check_branch
      %71 = sbr.rel (0) target = $region25
    $region24: #{tpu_custom_call.1} parent=1 // pred_region
      _
    $region25: #{tpu_custom_call.1} parent=1 // pred_fallthru
      _
    // Predicated region
    $region26: #{tpu_custom_call.1} parent=1 // pred_check
      _
    $region27: #{tpu_custom_call.1} parent=1 // pred_check_branch
      %73 = sbr.rel (0) target = $region29
    $region28: #{tpu_custom_call.1} parent=1 // pred_region
      _
    $region29: #{tpu_custom_call.1} parent=1 // pred_fallthru
      _
    // Predicated region
    $region30: #{tpu_custom_call.1} parent=1 // pred_check
      _
    $region31: #{tpu_custom_call.1} parent=1 // pred_check_branch
      %75 = sbr.rel (0) target = $region33
    $region32: #{tpu_custom_call.1} parent=1 // pred_region
      _
    $region33: #{tpu_custom_call.1} parent=1 // pred_fallthru
      _
    // Predicated region
    $region34: #{tpu_custom_call.1} parent=1 // pred_check
      _
    $region35: #{tpu_custom_call.1} parent=1 // pred_check_branch
      %77 = sbr.rel (0) target = $region37
    $region36: #{tpu_custom_call.1} parent=1 // pred_region
      %79 = dma.done [#allocation4], 128
    $region37: #{tpu_custom_call.1} parent=1 // pred_fallthru
      _
    // Predicated region
    $region38: #{tpu_custom_call.1} parent=1 // pred_check
      _
    $region39: #{tpu_custom_call.1} parent=1 // pred_check_branch
      %81 = sbr.rel (0) target = $region41
    $region40: #{tpu_custom_call.1} parent=1 // pred_region
      %83 = dma.done [#allocation7], 128
    $region41: #{tpu_custom_call.1} parent=1 // pred_fallthru
      _
    // Predicated region
    $region42: #{tpu_custom_call.1} parent=1 // pred_check
      _
    $region43: #{tpu_custom_call.1} parent=1 // pred_check_branch
      %85 = sbr.rel (0) target = $region45
    $region44: #{tpu_custom_call.1} parent=1 // pred_region
      %87 = dma.done [#allocation7], 1024
    $region45: #{tpu_custom_call.1} parent=1 // pred_fallthru
      _
    // Predicated region
    $region46: #{tpu_custom_call.1} parent=1 // pred_check
      _
    $region47: #{tpu_custom_call.1} parent=1 // pred_check_branch
      %89 = sbr.rel (0) target = $region49
    $region48: #{tpu_custom_call.1} parent=1 // pred_region
      %91 = dma.done [#allocation10], 1024
    $region49: #{tpu_custom_call.1} parent=1 // pred_fallthru
      _
    %s93 = sld [smem:[#allocation2]]
    %v94 = vld [vmem:[#allocation3] sm:$0xff]
    %v95 = vpack.c.bf16 %v94, %v94
    %v96 = vld [vmem:[#allocation6] sm:$0xf]
    %v97 = vld [vmem:[#allocation6 + $0x4] sm:$0xf]
    %v98 = vld [vmem:[%s5] sm:$0x1]
    %v100 = vperm.slane %v98, 0
    %v104 = vunpack.c.l.b16 %v96
    %v105 = vunpack.c.l.b16 %v97
    %v106 = vpack.c.b16 %v105, %v104
    %vm108 = vcmask 130048
    %v110 = vsel %vm108, %v95, 0
    %112 = vmatpush.bf16.msra.mxu0 0
    %113 = vmatpush.bf16.msra.mxu0 0
    %114 = vmatpush.bf16.msra.mxu0 0
    %115 = vmatpush.bf16.msra.mxu0 0
    %116 = vmatpush.bf16.msra.mxu0 0
    %117 = vmatpush.bf16.msra.mxu0 0
    %118 = vmatpush.bf16.msra.mxu0 0
    %119 = vmatpush.bf16.msra.mxu0 %v106
    %120 = vmatmul.bf16.gmra.mxu0 %v110
    %v121 = vpop.f32.mrf.mxu0
    %v122 = vadd.f32 %v100, %v121
    %v123 = vpop.f32.mrf.mxu0
    %124 = vdwg.mxu0
    %vm125 = vcmp.ge.f32.partialorder %v122, 0.0
    %v126 = vmul.f32 %v122, 0.01
    %v127 = vsel %vm125, %v122, %v126
    %v128 = vpack.c.bf16 %v127, %v127
    %v129 = vld [vmem:[#allocation8] sm:$0xf]
    %v130 = vld [vmem:[#allocation8 + $0x4] sm:$0xf]
    %v131 = vld [vmem:[#allocation8 + $0x8] sm:$0xf]
    %v132 = vld [vmem:[#allocation8 + $0xc] sm:$0xf]
    %v133 = vld [vmem:[#allocation8 + $0x10] sm:$0xf]
    %v134 = vld [vmem:[#allocation8 + $0x14] sm:$0xf]
    %v135 = vld [vmem:[#allocation8 + $0x18] sm:$0xf]
    %v136 = vld [vmem:[#allocation8 + $0x1c] sm:$0xf]
    %v137 = vld [vmem:[#allocation8 + $0x20] sm:$0xf]
    %v138 = vld [vmem:[#allocation8 + $0x24] sm:$0xf]
    %v139 = vld [vmem:[#allocation8 + $0x28] sm:$0xf]
    %v140 = vld [vmem:[#allocation8 + $0x2c] sm:$0xf]
    %v141 = vld [vmem:[#allocation8 + $0x30] sm:$0xf]
    %v142 = vld [vmem:[#allocation8 + $0x34] sm:$0xf]
    %v143 = vld [vmem:[#allocation8 + $0x38] sm:$0xf]
    %v144 = vld [vmem:[#allocation8 + $0x3c] sm:$0xf]
    %v145 = vld [vmem:[%s6] sm:$0x1]
    %v147 = vperm.slane %v145, 0
    %v165 = vunpack.c.l.b16 %v129
    %v166 = vunpack.c.l.b16 %v130
    %v167 = vunpack.c.l.b16 %v131
    %v168 = vunpack.c.l.b16 %v132
    %v169 = vunpack.c.l.b16 %v133
    %v170 = vunpack.c.l.b16 %v134
    %v171 = vunpack.c.l.b16 %v135
    %v172 = vunpack.c.l.b16 %v136
    %v173 = vunpack.c.l.b16 %v137
    %v174 = vunpack.c.l.b16 %v138
    %v175 = vunpack.c.l.b16 %v139
    %v176 = vunpack.c.l.b16 %v140
    %v177 = vunpack.c.l.b16 %v141
    %v178 = vunpack.c.l.b16 %v142
    %v179 = vunpack.c.l.b16 %v143
    %v180 = vunpack.c.l.b16 %v144
    %v181 = vpack.c.b16 %v166, %v165
    %v182 = vpack.c.b16 %v168, %v167
    %v183 = vpack.c.b16 %v170, %v169
    %v184 = vpack.c.b16 %v172, %v171
    %v185 = vpack.c.b16 %v174, %v173
    %v186 = vpack.c.b16 %v176, %v175
    %v187 = vpack.c.b16 %v178, %v177
    %v188 = vpack.c.b16 %v180, %v179
    %197 = vmatpush.bf16.msra.mxu0 %v188
    %198 = vmatpush.bf16.msra.mxu0 %v187
    %199 = vmatpush.bf16.msra.mxu0 %v186
    %200 = vmatpush.bf16.msra.mxu0 %v185
    %201 = vmatpush.bf16.msra.mxu0 %v184
    %202 = vmatpush.bf16.msra.mxu0 %v183
    %203 = vmatpush.bf16.msra.mxu0 %v182
    %204 = vmatpush.bf16.msra.mxu0 %v181
    %205 = vmatmul.bf16.gmra.mxu0 %v128
    %v206 = vpop.f32.mrf.mxu0
    %v207 = vadd.f32 %v147, %v206
    %v208 = vpop.f32.mrf.mxu0
    %209 = vdwg.mxu0
    %vm210 = vcmp.ge.f32.partialorder %v207, 0.0
    %v211 = vmul.f32 %v207, 0.01
    %v212 = vsel %vm210, %v207, %v211
    %v213 = vpack.c.bf16 %v212, %v212
    %v214 = vld [vmem:[#allocation9] sm:$0xf]
    %v215 = vld [vmem:[#allocation9 + $0x4] sm:$0xf]
    %v216 = vld [vmem:[#allocation9 + $0x8] sm:$0xf]
    %v217 = vld [vmem:[#allocation9 + $0xc] sm:$0xf]
    %v218 = vld [vmem:[#allocation9 + $0x10] sm:$0xf]
    %v219 = vld [vmem:[#allocation9 + $0x14] sm:$0xf]
    %v220 = vld [vmem:[#allocation9 + $0x18] sm:$0xf]
    %v221 = vld [vmem:[#allocation9 + $0x1c] sm:$0xf]
    %v222 = vld [vmem:[#allocation9 + $0x20] sm:$0xf]
    %v223 = vld [vmem:[#allocation9 + $0x24] sm:$0xf]
    %v224 = vld [vmem:[#allocation9 + $0x28] sm:$0xf]
    %v225 = vld [vmem:[#allocation9 + $0x2c] sm:$0xf]
    %v226 = vld [vmem:[#allocation9 + $0x30] sm:$0xf]
    %v227 = vld [vmem:[#allocation9 + $0x34] sm:$0xf]
    %v228 = vld [vmem:[#allocation9 + $0x38] sm:$0xf]
    %v229 = vld [vmem:[#allocation9 + $0x3c] sm:$0xf]
    %v230 = vld [vmem:[%s7] sm:$0x1]
    %v232 = vperm.slane %v230, 0
    %v250 = vunpack.c.l.b16 %v214
    %v251 = vunpack.c.l.b16 %v215
    %v252 = vunpack.c.l.b16 %v216
    %v253 = vunpack.c.l.b16 %v217
    %v254 = vunpack.c.l.b16 %v218
    %v255 = vunpack.c.l.b16 %v219
    %v256 = vunpack.c.l.b16 %v220
    %v257 = vunpack.c.l.b16 %v221
    %v258 = vunpack.c.l.b16 %v222
    %v259 = vunpack.c.l.b16 %v223
    %v260 = vunpack.c.l.b16 %v224
    %v261 = vunpack.c.l.b16 %v225
    %v262 = vunpack.c.l.b16 %v226
    %v263 = vunpack.c.l.b16 %v227
    %v264 = vunpack.c.l.b16 %v228
    %v265 = vunpack.c.l.b16 %v229
    %v266 = vpack.c.b16 %v251, %v250
    %v267 = vpack.c.b16 %v253, %v252
    %v268 = vpack.c.b16 %v255, %v254
    %v269 = vpack.c.b16 %v257, %v256
    %v270 = vpack.c.b16 %v259, %v258
    %v271 = vpack.c.b16 %v261, %v260
    %v272 = vpack.c.b16 %v263, %v262
    %v273 = vpack.c.b16 %v265, %v264
    %282 = vmatpush.bf16.msra.mxu0 %v273
    %283 = vmatpush.bf16.msra.mxu0 %v272
    %284 = vmatpush.bf16.msra.mxu0 %v271
    %285 = vmatpush.bf16.msra.mxu0 %v270
    %286 = vmatpush.bf16.msra.mxu0 %v269
    %287 = vmatpush.bf16.msra.mxu0 %v268
    %288 = vmatpush.bf16.msra.mxu0 %v267
    %289 = vmatpush.bf16.msra.mxu0 %v266
    %290 = vmatmul.bf16.gmra.mxu0 %v213
    %v291 = vpop.f32.mrf.mxu0
    %v292 = vadd.f32 %v232, %v291
    %v293 = vpop.f32.mrf.mxu0
    %294 = vdwg.mxu0
    %v295 = vtanh.pop %v292
    %v296 = vstv %s93
    %v297 = vmul.f32 %v295, %v296
    %v298 = vlaneseq
    %v299 = vand.u32 %v298, 127
    %vm300 = vcmp.lt.s32.totalorder %v299, 2
    %v301 = vsel %vm300, %v297, %v292
    %302 = vst [vmem:[#allocation11] sm:$0xff] %v301
    // Predicated region
    $region50: #{tpu_custom_call.1} parent=1 // pred_check
      _
    $region51: #{tpu_custom_call.1} parent=1 // pred_check_branch
      %304 = sbr.rel (0) target = $region53
    $region52: #{tpu_custom_call.1} parent=1 // pred_region
      %306 = vsyncadd [#allocation5], 0
      %s308 = sshll.u32 [#allocation11], 4
      %s309 = int_to_ptr.vmem [resolvable:$true] %s308
      %s310 = sshll.u32 %s8, 4
      %s311 = int_to_ptr.hbm [resolvable:$true] %s310
      %313 = dma.vmem_to_hbm [thread:$0]  %s309, 128, %s311, [#allocation5]
    $region53: #{tpu_custom_call.1} parent=1 // pred_fallthru
      _
    // Predicated region
    $region54: #{tpu_custom_call.1} parent=1 // pred_check
      _
    $region55: #{tpu_custom_call.1} parent=1 // pred_check_branch
      %315 = sbr.rel (0) target = $region57
    $region56: #{tpu_custom_call.1} parent=1 // pred_region
      %317 = dma.done [#allocation5], 128
    $region57: #{tpu_custom_call.1} parent=1 // pred_fallthru
      _
    %318 = vsyncpa [#allocation4], 1
    %319 = vsyncpa [#allocation7], 1
    %320 = vsyncpa [#allocation10], 1
    %321 = vsyncpa [#allocation5], 1

</llo_original>
